<compile_context>
chip_gen: v5e
topology: v5e:2x2
jax: 0.10.0
libtpu: 0.0.40
codegen_flags: <defaults>
</compile_context>

<pallas_src>
import numpy as np
import jax
import jax.numpy as jnp
from jax.experimental import pallas as pl
from jax.experimental.pallas import tpu as pltpu

# ---- static shapes -------------------------------------------------------
N = 2                # batch
L_IN = 290           # input sequence length (NCL, C=1)
L_C1 = L_IN - 2      # 288 after conv1
L_P1 = L_C1 // 2     # 144 after pool1
L_C2 = L_P1 - 2      # 142 after conv2
L_P2 = L_C2 // 2     # 71  after pool2
C1 = 6               # conv1 out channels
C1P = 8              # conv1 out channels padded to a full sublane tile
C2 = 16              # conv2 out channels
FLAT = 142
ROWS = (N * C2 * L_P2) // FLAT   # 16 rows after view(-1, 142)

# slab layout (all row starts 8-aligned)
SLAB_ROWS = 160
R_W1 = 0     # rows  0:16  cols 0:3 conv1 weight (tiled), col 3 conv1 bias
R_W2 = 16    # rows 16:48  cols 0:48 block conv2 weight, col 48 conv2 bias
R_FB1 = 48   # row  48     cols 0:120 fc1 bias
R_FB2 = 56   # row  56     cols 0:84  fc2 bias
R_FB3 = 64   # row  64     cols 0:128 fc3 bias (zero-padded)
R_FW3 = 72   # rows 72:156 cols 0:128 fc3 weight.T (zero-padded to 128 cols)

_VMEM = pl.BlockSpec(memory_space=pltpu.MemorySpace.VMEM)


# ---- the single fused kernel ----------------------------------------------
def cnn_kernel(x_ref, slab_ref, sel1_ref, fw1a_ref, fw1b_ref, fw2_ref, o_ref):
    f32 = jnp.float32

    # ---- small parameters: static slices of the packed slab ----------------
    w1 = slab_ref[R_W1:R_W1 + N * C1P, 0:3]             # (16, 3)
    b1 = slab_ref[R_W1:R_W1 + N * C1P, 3:4]             # (16, 1)
    w2 = slab_ref[R_W2:R_W2 + N * C2, 0:3 * N * C1P]    # (32, 48)
    b2 = slab_ref[R_W2:R_W2 + N * C2, 48:49]            # (32, 1)
    fb1 = slab_ref[R_FB1:R_FB1 + 1, 0:120]              # (1, 120)
    fb2 = slab_ref[R_FB2:R_FB2 + 1, 0:84]               # (1, 84)
    fb3 = slab_ref[R_FB3:R_FB3 + 1, :]                  # (1, 128)
    fw3 = slab_ref[R_FW3:R_FW3 + 84, :]                 # (84, 128)

    # ---- conv1 (1->6, k=3): channel-packed sublanes, pure VPU --------------
    # Replicate each batch row into 8 sublanes (sublane broadcast), no matmul.
    xe = jnp.concatenate(
        [jnp.broadcast_to(x_ref[n:n + 1, :], (C1P, L_IN)) for n in range(N)],
        axis=0)                                          # (16, 290)
    z1 = (w1[:, 0:1] * xe[:, 0:L_C1]
          + w1[:, 1:2] * xe[:, 1:L_C1 + 1]
          + w1[:, 2:3] * xe[:, 2:L_C1 + 2]) + b1         # (16, 288)

    # ---- relu + maxpool(2): neighbour max + ONE even-column selection matmul
    m1 = jnp.maximum(jnp.maximum(z1[:, 0:L_C1 - 1], z1[:, 1:L_C1]), 0.0)   # (16, 287)
    h1 = jnp.dot(m1, sel1_ref[...], preferred_element_type=f32)            # (16, 144)

    # ---- conv2 (6->16, k=3): one block-structured im2col matmul ------------
    a2 = jnp.concatenate([h1[:, 0:L_C2],
                          h1[:, 1:L_C2 + 1],
                          h1[:, 2:L_C2 + 2]], axis=0)    # (48, 142)
    z2 = jnp.dot(w2, a2, preferred_element_type=f32) + b2                  # (32, 142)

    # ---- relu + maxpool(2) with the even-column selection folded into fc1 --
    r2 = jnp.maximum(jnp.maximum(z2[:, 0:L_C2 - 1], z2[:, 1:L_C2]), 0.0)   # (32, 141)

    # view(-1,142): conv2 rows were permuted even-channels-first per batch, so
    # the flatten halves are aligned 8-sublane slices of r2.
    ev = jnp.concatenate([r2[n * C2:n * C2 + C1P, :] for n in range(N)], axis=0)        # (16, 141)
    od = jnp.concatenate([r2[n * C2 + C1P:(n + 1) * C2, :] for n in range(N)], axis=0)  # (16, 141)

    f1 = (jnp.dot(ev, fw1a_ref[...], preferred_element_type=f32)
          + jnp.dot(od, fw1b_ref[...], preferred_element_type=f32)
          + fb1)                                                            # (16, 120)
    h = jnp.maximum(f1, 0.0)
    h = jnp.maximum(jnp.dot(h, fw2_ref[...], preferred_element_type=f32)
                    + fb2, 0.0)                                             # (16, 84)
    # fc3 padded to 128 output columns -> lane-dense, unmasked store.
    o_ref[...] = jnp.dot(h, fw3, preferred_element_type=f32) + fb3          # (16, 128)


# ---- one-time parameter preparation (outside the jitted forward) ----------
def prepare_params(params):
    (w1c, b1c, w2c, b2c, fw1, fb1, fw2, fb2, fw3, fb3) = params
    f32 = jnp.float32

    # conv1: (6,1,3) -> (8,3) zero-padded channels, tiled across batch blocks.
    w1m = jnp.concatenate([w1c.reshape(C1, 3),
                           jnp.zeros((C1P - C1, 3), f32)], axis=0)
    b1m = jnp.concatenate([b1c, jnp.zeros((C1P - C1,), f32)]).reshape(C1P, 1)
    w1m = jnp.tile(w1m, (N, 1))                                  # (16, 3)
    b1m = jnp.tile(b1m, (N, 1))                                  # (16, 1)

    # conv2: block-structured (32,48) weight; rows = n*16 + p with p the
    # even-first permuted out channel, cols = k*16 + n*8 + ci matching the
    # in-kernel im2col layout (concat over k of sublane-packed h1 rows).
    perm = jnp.array([0, 2, 4, 6, 8, 10, 12, 14, 1, 3, 5, 7, 9, 11, 13, 15],
                     dtype=jnp.int32)
    w2p = w2c[perm]                                              # (16, 6, 3)
    wk = jnp.transpose(w2p, (0, 2, 1))                           # (16, 3, 6)
    wk = jnp.concatenate([wk, jnp.zeros((C2, 3, C1P - C1), f32)], axis=2)  # (16,3,8)
    blocks = []
    for n in range(N):
        full = jnp.zeros((C2, 3, N, C1P), f32).at[:, :, n, :].set(wk)
        blocks.append(full.reshape(C2, 3 * N * C1P))             # (16, 48)
    w2m = jnp.concatenate(blocks, axis=0)                        # (32, 48)
    b2m = jnp.tile(b2c[perm].reshape(C2, 1), (N, 1))             # (32, 1)

    # pool-1 even-column selection matrix (only selection matmul left).
    sel1 = (jnp.arange(L_C1 - 1)[:, None]
            == 2 * jnp.arange(L_P1)[None, :]).astype(f32)        # (287, 144)

    # fc1 with the pool-2 even-column selection folded in (odd rows zero).
    fw1t = fw1.T                                                 # (142, 120)
    fw1a = jnp.zeros((L_C2 - 1, 120), f32).at[0::2, :].set(fw1t[0:L_P2, :])     # (141,120)
    fw1b = jnp.zeros((L_C2 - 1, 120), f32).at[0::2, :].set(fw1t[L_P2:FLAT, :])  # (141,120)

    fw2t = fw2.T                                                 # (120, 84)
    # fc3 padded to 128 lane-dense output columns.
    fw3p = jnp.zeros((84, 128), f32).at[:, 0:2].set(fw3.T)
    fb3p = jnp.zeros((128,), f32).at[0:2].set(fb3)

    # pack all small parameters into one (160, 128) slab -> one DMA.
    slab = jnp.zeros((SLAB_ROWS, 128), f32)
    slab = slab.at[R_W1:R_W1 + N * C1P, 0:3].set(w1m)
    slab = slab.at[R_W1:R_W1 + N * C1P, 3:4].set(b1m)
    slab = slab.at[R_W2:R_W2 + N * C2, 0:3 * N * C1P].set(w2m)
    slab = slab.at[R_W2:R_W2 + N * C2, 48:49].set(b2m)
    slab = slab.at[R_FB1, 0:120].set(fb1)
    slab = slab.at[R_FB2, 0:84].set(fb2)
    slab = slab.at[R_FB3, :].set(fb3p)
    slab = slab.at[R_FW3:R_FW3 + 84, :].set(fw3p)
    return (slab, sel1, fw1a, fw1b, fw2t)


# ---- wrapper: a single pallas_call ----------------------------------------
def cnn_forward(x, prep):
    slab, sel1, fw1a, fw1b, fw2t = prep
    x2 = x.reshape(N, L_IN)              # (N,1,L) -> (N,L), metadata-only
    out = pl.pallas_call(
        cnn_kernel,
        out_shape=jax.ShapeDtypeStruct((ROWS, 128), jnp.float32),
        in_specs=[_VMEM] * 6,
        out_specs=_VMEM,
    )(x2, slab, sel1, fw1a, fw1b, fw2t)
    return out[:, :2]                    # drop the fc3 lane padding


# ---- deterministic parameter init (PyTorch-style uniform bounds) ----------
def init_params(key):
    ks = jax.random.split(key, 10)

    def u(k, shape, fan_in):
        bound = 1.0 / np.sqrt(fan_in)
        return jax.random.uniform(k, shape, jnp.float32, -bound, bound)

    w1c = u(ks[0], (C1, 1, 3), 3)
    b1c = u(ks[1], (C1,), 3)
    w2c = u(ks[2], (C2, C1, 3), C1 * 3)
    b2c = u(ks[3], (C2,), C1 * 3)
    fw1 = u(ks[4], (120, 142), 142)
    fb1 = u(ks[5], (120,), 142)
    fw2 = u(ks[6], (84, 120), 120)
    fb2 = u(ks[7], (84,), 120)
    fw3 = u(ks[8], (2, 84), 84)
    fb3 = u(ks[9], (2,), 84)
    return (w1c, b1c, w2c, b2c, fw1, fb1, fw2, fb2, fw3, fb3)


# ---- pure-JAX reference (same math, no Pallas) ----------------------------
def ref_forward(x, params):
    (w1c, b1c, w2c, b2c, fw1, fb1, fw2, fb2, fw3, fb3) = params

    def conv1d(h, w, b):
        L = h.shape[-1]
        out = jnp.zeros((h.shape[0], w.shape[0], L - 2), jnp.float32)
        for k in range(3):
            out = out + jnp.einsum('ncl,oc->nol', h[:, :, k:k + L - 2], w[:, :, k])
        return out + b[None, :, None]

    def pool(h):
        Lp = h.shape[-1] // 2
        return jnp.maximum(h[..., 0:2 * Lp:2], h[..., 1:2 * Lp:2])

    h = pool(jax.nn.relu(conv1d(x, w1c, b1c)))
    h = pool(jax.nn.relu(conv1d(h, w2c, b2c)))
    h = h.reshape(-1, FLAT)
    h = jax.nn.relu(h @ fw1.T + fb1)
    h = jax.nn.relu(h @ fw2.T + fb2)
    return h @ fw3.T + fb3


if __name__ == "__main__":
    key = jax.random.PRNGKey(0)
    k_x, k_p = jax.random.split(key)
    x = jax.random.normal(k_x, (N, 1, L_IN), jnp.float32)
    params = init_params(k_p)

    prep = prepare_params(params)        # done once, outside the jitted forward

    out = jax.jit(cnn_forward)(x, prep)
    out = jax.block_until_ready(out)

    ref = ref_forward(x, params)
    assert out.shape == (ROWS, 2), out.shape
    np.testing.assert_allclose(np.asarray(out), np.asarray(ref),
                               rtol=5e-4, atol=5e-4)
    print("KERNEL_OK")
</pallas_src>

<mosaic_0001>
module attributes {stable_mosaic.version = 11 : i64} {
  func.func @cnn_kernel(%arg0: memref<2x290xf32, #tpu.memory_space<vmem>>, %arg1: memref<160x128xf32, #tpu.memory_space<vmem>>, %arg2: memref<287x144xf32, #tpu.memory_space<vmem>>, %arg3: memref<141x120xf32, #tpu.memory_space<vmem>>, %arg4: memref<141x120xf32, #tpu.memory_space<vmem>>, %arg5: memref<120x84xf32, #tpu.memory_space<vmem>>, %arg6: memref<16x128xf32, #tpu.memory_space<vmem>>) attributes {dimension_semantics = [], scalar_prefetch = 0 : i64, scratch_operands = 0 : i64, tpu.core_type = #tpu.core_type<tc>} {
    %c0 = arith.constant 0 : index
    %c0_0 = arith.constant 0 : index
    %0 = vector.load %arg1[%c0, %c0_0] : memref<160x128xf32, #tpu.memory_space<vmem>>, vector<16x3xf32>
    %c0_1 = arith.constant 0 : index
    %c3 = arith.constant 3 : index
    %1 = vector.load %arg1[%c0_1, %c3] : memref<160x128xf32, #tpu.memory_space<vmem>>, vector<16x1xf32>
    %c16 = arith.constant 16 : index
    %c0_2 = arith.constant 0 : index
    %2 = vector.load %arg1[%c16, %c0_2] : memref<160x128xf32, #tpu.memory_space<vmem>>, vector<32x48xf32>
    %c16_3 = arith.constant 16 : index
    %c48 = arith.constant 48 : index
    %3 = vector.load %arg1[%c16_3, %c48] : memref<160x128xf32, #tpu.memory_space<vmem>>, vector<32x1xf32>
    %c48_4 = arith.constant 48 : index
    %c0_5 = arith.constant 0 : index
    %4 = vector.load %arg1[%c48_4, %c0_5] : memref<160x128xf32, #tpu.memory_space<vmem>>, vector<1x120xf32>
    %c56 = arith.constant 56 : index
    %c0_6 = arith.constant 0 : index
    %5 = vector.load %arg1[%c56, %c0_6] : memref<160x128xf32, #tpu.memory_space<vmem>>, vector<1x84xf32>
    %c64 = arith.constant 64 : index
    %c0_7 = arith.constant 0 : index
    %6 = vector.load %arg1[%c64, %c0_7] : memref<160x128xf32, #tpu.memory_space<vmem>>, vector<1x128xf32>
    %c72 = arith.constant 72 : index
    %c0_8 = arith.constant 0 : index
    %7 = vector.load %arg1[%c72, %c0_8] : memref<160x128xf32, #tpu.memory_space<vmem>>, vector<84x128xf32>
    %c0_9 = arith.constant 0 : index
    %c0_10 = arith.constant 0 : index
    %8 = vector.load %arg0[%c0_9, %c0_10] : memref<2x290xf32, #tpu.memory_space<vmem>>, vector<1x290xf32>
    %9 = vector.shape_cast %8 : vector<1x290xf32> to vector<1x290xf32>
    %10 = vector.broadcast %9 : vector<1x290xf32> to vector<8x290xf32>
    %c1 = arith.constant 1 : index
    %c0_11 = arith.constant 0 : index
    %11 = vector.load %arg0[%c1, %c0_11] : memref<2x290xf32, #tpu.memory_space<vmem>>, vector<1x290xf32>
    %12 = vector.shape_cast %11 : vector<1x290xf32> to vector<1x290xf32>
    %13 = vector.broadcast %12 : vector<1x290xf32> to vector<8x290xf32>
    %14 = tpu.concatenate %10, %13 in 0 : vector<8x290xf32>, vector<8x290xf32> -> vector<16x290xf32>
    %15 = vector.extract_strided_slice %0 {offsets = [0, 0], sizes = [16, 1], strides = [1, 1]} : vector<16x3xf32> to vector<16x1xf32>
    %16 = vector.extract_strided_slice %14 {offsets = [0, 0], sizes = [16, 288], strides = [1, 1]} : vector<16x290xf32> to vector<16x288xf32>
    %17 = vector.broadcast %15 : vector<16x1xf32> to vector<16x288xf32>
    %18 = arith.mulf %17, %16 : vector<16x288xf32>
    %19 = vector.extract_strided_slice %0 {offsets = [0, 1], sizes = [16, 1], strides = [1, 1]} : vector<16x3xf32> to vector<16x1xf32>
    %20 = vector.extract_strided_slice %14 {offsets = [0, 1], sizes = [16, 288], strides = [1, 1]} : vector<16x290xf32> to vector<16x288xf32>
    %21 = vector.broadcast %19 : vector<16x1xf32> to vector<16x288xf32>
    %22 = arith.mulf %21, %20 : vector<16x288xf32>
    %23 = arith.addf %18, %22 : vector<16x288xf32>
    %24 = vector.extract_strided_slice %0 {offsets = [0, 2], sizes = [16, 1], strides = [1, 1]} : vector<16x3xf32> to vector<16x1xf32>
    %25 = vector.extract_strided_slice %14 {offsets = [0, 2], sizes = [16, 288], strides = [1, 1]} : vector<16x290xf32> to vector<16x288xf32>
    %26 = vector.broadcast %24 : vector<16x1xf32> to vector<16x288xf32>
    %27 = arith.mulf %26, %25 : vector<16x288xf32>
    %28 = arith.addf %23, %27 : vector<16x288xf32>
    %29 = vector.broadcast %1 : vector<16x1xf32> to vector<16x288xf32>
    %30 = arith.addf %28, %29 : vector<16x288xf32>
    %31 = vector.extract_strided_slice %30 {offsets = [0, 0], sizes = [16, 287], strides = [1, 1]} : vector<16x288xf32> to vector<16x287xf32>
    %32 = vector.extract_strided_slice %30 {offsets = [0, 1], sizes = [16, 287], strides = [1, 1]} : vector<16x288xf32> to vector<16x287xf32>
    %33 = arith.maximumf %31, %32 : vector<16x287xf32>
    %cst = arith.constant 0.000000e+00 : f32
    %34 = vector.broadcast %cst : f32 to vector<16x287xf32>
    %35 = arith.maximumf %33, %34 : vector<16x287xf32>
    %c0_12 = arith.constant 0 : index
    %c0_13 = arith.constant 0 : index
    %36 = vector.load %arg2[%c0_12, %c0_13] : memref<287x144xf32, #tpu.memory_space<vmem>>, vector<287x144xf32>
    %cst_14 = arith.constant dense<0.000000e+00> : vector<16x144xf32>
    %37 = tpu.matmul %35, %36, %cst_14 {dimension_numbers = #tpu.dot_dimension_numbers<[1], [0], [0], [1], [0, 0, 1, 1], [], []>} : vector<16x287xf32>, vector<287x144xf32>, vector<16x144xf32> -> vector<16x144xf32>
    %38 = vector.extract_strided_slice %37 {offsets = [0, 0], sizes = [16, 142], strides = [1, 1]} : vector<16x144xf32> to vector<16x142xf32>
    %39 = vector.extract_strided_slice %37 {offsets = [0, 1], sizes = [16, 142], strides = [1, 1]} : vector<16x144xf32> to vector<16x142xf32>
    %40 = vector.extract_strided_slice %37 {offsets = [0, 2], sizes = [16, 142], strides = [1, 1]} : vector<16x144xf32> to vector<16x142xf32>
    %41 = tpu.concatenate %38, %39, %40 in 0 : vector<16x142xf32>, vector<16x142xf32>, vector<16x142xf32> -> vector<48x142xf32>
    %cst_15 = arith.constant dense<0.000000e+00> : vector<32x142xf32>
    %42 = tpu.matmul %2, %41, %cst_15 {dimension_numbers = #tpu.dot_dimension_numbers<[1], [0], [0], [1], [0, 0, 1, 1], [], []>} : vector<32x48xf32>, vector<48x142xf32>, vector<32x142xf32> -> vector<32x142xf32>
    %43 = vector.broadcast %3 : vector<32x1xf32> to vector<32x142xf32>
    %44 = arith.addf %42, %43 : vector<32x142xf32>
    %45 = vector.extract_strided_slice %44 {offsets = [0, 0], sizes = [32, 141], strides = [1, 1]} : vector<32x142xf32> to vector<32x141xf32>
    %46 = vector.extract_strided_slice %44 {offsets = [0, 1], sizes = [32, 141], strides = [1, 1]} : vector<32x142xf32> to vector<32x141xf32>
    %47 = arith.maximumf %45, %46 : vector<32x141xf32>
    %cst_16 = arith.constant 0.000000e+00 : f32
    %48 = vector.broadcast %cst_16 : f32 to vector<32x141xf32>
    %49 = arith.maximumf %47, %48 : vector<32x141xf32>
    %50 = vector.extract_strided_slice %49 {offsets = [0, 0], sizes = [8, 141], strides = [1, 1]} : vector<32x141xf32> to vector<8x141xf32>
    %51 = vector.extract_strided_slice %49 {offsets = [16, 0], sizes = [8, 141], strides = [1, 1]} : vector<32x141xf32> to vector<8x141xf32>
    %52 = tpu.concatenate %50, %51 in 0 : vector<8x141xf32>, vector<8x141xf32> -> vector<16x141xf32>
    %53 = vector.extract_strided_slice %49 {offsets = [8, 0], sizes = [8, 141], strides = [1, 1]} : vector<32x141xf32> to vector<8x141xf32>
    %54 = vector.extract_strided_slice %49 {offsets = [24, 0], sizes = [8, 141], strides = [1, 1]} : vector<32x141xf32> to vector<8x141xf32>
    %55 = tpu.concatenate %53, %54 in 0 : vector<8x141xf32>, vector<8x141xf32> -> vector<16x141xf32>
    %c0_17 = arith.constant 0 : index
    %c0_18 = arith.constant 0 : index
    %56 = vector.load %arg3[%c0_17, %c0_18] : memref<141x120xf32, #tpu.memory_space<vmem>>, vector<141x120xf32>
    %cst_19 = arith.constant dense<0.000000e+00> : vector<16x120xf32>
    %57 = tpu.matmul %52, %56, %cst_19 {dimension_numbers = #tpu.dot_dimension_numbers<[1], [0], [0], [1], [0, 0, 1, 1], [], []>} : vector<16x141xf32>, vector<141x120xf32>, vector<16x120xf32> -> vector<16x120xf32>
    %c0_20 = arith.constant 0 : index
    %c0_21 = arith.constant 0 : index
    %58 = vector.load %arg4[%c0_20, %c0_21] : memref<141x120xf32, #tpu.memory_space<vmem>>, vector<141x120xf32>
    %cst_22 = arith.constant dense<0.000000e+00> : vector<16x120xf32>
    %59 = tpu.matmul %55, %58, %cst_22 {dimension_numbers = #tpu.dot_dimension_numbers<[1], [0], [0], [1], [0, 0, 1, 1], [], []>} : vector<16x141xf32>, vector<141x120xf32>, vector<16x120xf32> -> vector<16x120xf32>
    %60 = arith.addf %57, %59 : vector<16x120xf32>
    %61 = vector.broadcast %4 : vector<1x120xf32> to vector<16x120xf32>
    %62 = arith.addf %60, %61 : vector<16x120xf32>
    %cst_23 = arith.constant 0.000000e+00 : f32
    %63 = vector.broadcast %cst_23 : f32 to vector<16x120xf32>
    %64 = arith.maximumf %62, %63 : vector<16x120xf32>
    %c0_24 = arith.constant 0 : index
    %c0_25 = arith.constant 0 : index
    %65 = vector.load %arg5[%c0_24, %c0_25] : memref<120x84xf32, #tpu.memory_space<vmem>>, vector<120x84xf32>
    %cst_26 = arith.constant dense<0.000000e+00> : vector<16x84xf32>
    %66 = tpu.matmul %64, %65, %cst_26 {dimension_numbers = #tpu.dot_dimension_numbers<[1], [0], [0], [1], [0, 0, 1, 1], [], []>} : vector<16x120xf32>, vector<120x84xf32>, vector<16x84xf32> -> vector<16x84xf32>
    %67 = vector.broadcast %5 : vector<1x84xf32> to vector<16x84xf32>
    %68 = arith.addf %66, %67 : vector<16x84xf32>
    %cst_27 = arith.constant 0.000000e+00 : f32
    %69 = vector.broadcast %cst_27 : f32 to vector<16x84xf32>
    %70 = arith.maximumf %68, %69 : vector<16x84xf32>
    %cst_28 = arith.constant dense<0.000000e+00> : vector<16x128xf32>
    %71 = tpu.matmul %70, %7, %cst_28 {dimension_numbers = #tpu.dot_dimension_numbers<[1], [0], [0], [1], [0, 0, 1, 1], [], []>} : vector<16x84xf32>, vector<84x128xf32>, vector<16x128xf32> -> vector<16x128xf32>
    %72 = vector.broadcast %6 : vector<1x128xf32> to vector<16x128xf32>
    %73 = arith.addf %71, %72 : vector<16x128xf32>
    %c0_29 = arith.constant 0 : index
    %c0_30 = arith.constant 0 : index
    %74 = vector.load %arg6[%c0_29, %c0_30] : memref<16x128xf32, #tpu.memory_space<vmem>>, vector<16x128xf32>
    tpu.vector_store %arg6[%c0_29, %c0_30], %73 {strides = array<i32>} : memref<16x128xf32, #tpu.memory_space<vmem>>, vector<16x128xf32>,
    return
  }
}

</mosaic_0001>

<llo_original>
// kernel: cnn_forward.1
$region0: #{cnn_forward.1}
  #allocation0 [shape = 'u32[]', space=smem, size = 0x4, offset = 0x4, fixed_abs, tag = 'smem constant byte address 0x4 - core index']
  #allocation1 [shape = 'u32[72,128]{1,0:T(1,128)}', space=vmem, size = 0x9000, scoped, tag = 'internal scratch']
  %s0 = inlined_call_operand.vmem [shape: f32[2,290], index: 0, kind: input, shape index: {}]
  %s1 = inlined_call_operand.vmem [shape: f32[160,128], index: 1, kind: input, shape index: {}]
  %s2 = inlined_call_operand.vmem [shape: f32[287,144], index: 2, kind: input, shape index: {}]
  %s3 = inlined_call_operand.vmem [shape: f32[141,120], index: 3, kind: input, shape index: {}]
  %s4 = inlined_call_operand.vmem [shape: f32[141,120], index: 4, kind: input, shape index: {}]
  %s5 = inlined_call_operand.vmem [shape: f32[120,84], index: 5, kind: input, shape index: {}]
  %s6 = inlined_call_operand.vmem [shape: f32[16,128], index: 6, kind: output, shape index: {}]
  %s7 = sld [smem:[#allocation0]]
  $region34: #{cnn_forward.1} parent=0
    _
  %s9 = ssub.s32 1, %s7
  %s10 = scalar_select 0, %s9, %s7
  // Predicated region
  $region2: #{cnn_forward.1} parent=0 // pred_check
    _
  $region3: #{cnn_forward.1} parent=0 // pred_check_branch
    %12 = sbr.rel (0) target = $region5
  $region4: #{cnn_forward.1} parent=0 // pred_region
    _
  $region5: #{cnn_forward.1} parent=0 // pred_fallthru
    _
  // Predicated region
  $region6: #{cnn_forward.1} parent=0 // pred_check
    _
  $region7: #{cnn_forward.1} parent=0 // pred_check_branch
    %14 = sbr.rel (0) target = $region9
  $region8: #{cnn_forward.1} parent=0 // pred_region
    _
  $region9: #{cnn_forward.1} parent=0 // pred_fallthru
    _
  // Predicated region
  $region10: #{cnn_forward.1} parent=0 // pred_check
    _
  $region11: #{cnn_forward.1} parent=0 // pred_check_branch
    %16 = sbr.rel (0) target = $region13
  $region12: #{cnn_forward.1} parent=0 // pred_region
    _
  $region13: #{cnn_forward.1} parent=0 // pred_fallthru
    _
  // Predicated region
  $region14: #{cnn_forward.1} parent=0 // pred_check
    _
  $region15: #{cnn_forward.1} parent=0 // pred_check_branch
    %18 = sbr.rel (0) target = $region17
  $region16: #{cnn_forward.1} parent=0 // pred_region
    _
  $region17: #{cnn_forward.1} parent=0 // pred_fallthru
    _
  // Predicated region
  $region18: #{cnn_forward.1} parent=0 // pred_check
    _
  $region19: #{cnn_forward.1} parent=0 // pred_check_branch
    %20 = sbr.rel (0) target = $region21
  $region20: #{cnn_forward.1} parent=0 // pred_region
    _
  $region21: #{cnn_forward.1} parent=0 // pred_fallthru
    _
  // Predicated region
  $region22: #{cnn_forward.1} parent=0 // pred_check
    _
  $region23: #{cnn_forward.1} parent=0 // pred_check_branch
    %22 = sbr.rel (0) target = $region25
  $region24: #{cnn_forward.1} parent=0 // pred_region
    _
  $region25: #{cnn_forward.1} parent=0 // pred_fallthru
    _
  %v23 = vld [vmem:[%s1] sm:$0xff]
  %v24 = vld [vmem:[%s1 + $0x8] sm:$0xff]
  %v25 = vld [vmem:[%s1 + $0x10] sm:$0xff]
  %v26 = vld [vmem:[%s1 + $0x18] sm:$0xff]
  %v27 = vld [vmem:[%s1 + $0x20] sm:$0xff]
  %v28 = vld [vmem:[%s1 + $0x28] sm:$0xff]
  %v29 = vld [vmem:[%s1 + $0x30] sm:$0x1]
  %v30 = vld [vmem:[%s1 + $0x38] sm:$0x1]
  %v31 = vld [vmem:[%s1 + $0x40] sm:$0x1]
  %v32 = vld [vmem:[%s1 + $0x48] sm:$0xff]
  %v33 = vld [vmem:[%s1 + $0x50] sm:$0xff]
  %v34 = vld [vmem:[%s1 + $0x58] sm:$0xff]
  %v35 = vld [vmem:[%s1 + $0x60] sm:$0xff]
  %v36 = vld [vmem:[%s1 + $0x68] sm:$0xff]
  %v37 = vld [vmem:[%s1 + $0x70] sm:$0xff]
  %v38 = vld [vmem:[%s1 + $0x78] sm:$0xff]
  %v39 = vld [vmem:[%s1 + $0x80] sm:$0xff]
  %v40 = vld [vmem:[%s1 + $0x88] sm:$0xff]
  %v41 = vld [vmem:[%s1 + $0x90] sm:$0xff]
  %v42 = vld [vmem:[%s1 + $0x98] sm:$0xf]
  %v43 = vld [vmem:[%s0] ss:$2 sm:$0x7]
  %v45 = vperm.slane %v43, 0
  %v46 = vperm.slane %v43, 1
  %v47 = vperm.slane %v43, 2
  %s51 = scalar_lea.vmem %s0, 1
  %v52 = vld [vmem:[%s51] ss:$2 sm:$0x7]
  %v54 = vperm.slane %v52, 0
  %v55 = vperm.slane %v52, 1
  %v56 = vperm.slane %v52, 2
  %61 = vset.pattern.permute.xlu0 0
  %62 = vperm.xlu0 %61, %v23
  %v63 = vpop.permute.xlu0 %62
  %66 = vset.pattern.permute.xlu0 0
  %67 = vperm.xlu0 %66, %v24
  %v68 = vpop.permute.xlu0 %67
  %v70 = vmul.f32 %v63, %v45
  %v71 = vmul.f32 %v63, %v46
  %v72 = vmul.f32 %v63, %v47
  %v73 = vmul.f32 %v68, %v54
  %v74 = vmul.f32 %v68, %v55
  %v75 = vmul.f32 %v68, %v56
  %76 = vset.pattern.permute.xlu0 1
  %77 = vperm.xlu0 %76, %v23
  %v78 = vpop.permute.xlu0 %77
  %80 = vset.pattern.permute.xlu0 1
  %81 = vperm.xlu0 %80, %v24
  %v82 = vpop.permute.xlu0 %81
  %v84 = vmul.f32 %v78, %v45
  %v85 = vmul.f32 %v78, %v46
  %v86 = vmul.f32 %v78, %v47
  %v87 = vmul.f32 %v82, %v54
  %v88 = vmul.f32 %v82, %v55
  %v89 = vmul.f32 %v82, %v56
  %96 = vrot.lane.b32.xlu0 %v84, 127
  %v97 = vpop.permute.xlu0 %96
  %98 = vrot.lane.b32.xlu0 %v85, 127
  %v99 = vpop.permute.xlu0 %98
  %100 = vrot.lane.b32.xlu0 %v86, 127
  %v101 = vpop.permute.xlu0 %100
  %102 = vrot.lane.b32.xlu0 %v87, 127
  %v103 = vpop.permute.xlu0 %102
  %104 = vrot.lane.b32.xlu0 %v88, 127
  %v105 = vpop.permute.xlu0 %104
  %106 = vrot.lane.b32.xlu0 %v89, 127
  %v107 = vpop.permute.xlu0 %106
  %vm108 = vcmask 1039360
  %v109 = vsel %vm108, %v97, %v99
  %v110 = vsel %vm108, %v99, %v101
  %v111 = vsel %vm108, %v103, %v105
  %v112 = vsel %vm108, %v105, %v107
  %v119 = vadd.f32 %v70, %v109
  %v120 = vadd.f32 %v71, %v110
  %v121 = vadd.f32 %v72, %v101
  %v122 = vadd.f32 %v73, %v111
  %v123 = vadd.f32 %v74, %v112
  %v124 = vadd.f32 %v75, %v107
  %125 = vset.pattern.permute.xlu0 2
  %126 = vperm.xlu0 %125, %v23
  %v127 = vpop.permute.xlu0 %126
  %129 = vset.pattern.permute.xlu0 2
  %130 = vperm.xlu0 %129, %v24
  %v131 = vpop.permute.xlu0 %130
  %v133 = vmul.f32 %v127, %v45
  %v134 = vmul.f32 %v127, %v46
  %v135 = vmul.f32 %v127, %v47
  %v136 = vmul.f32 %v131, %v54
  %v137 = vmul.f32 %v131, %v55
  %v138 = vmul.f32 %v131, %v56
  %145 = vrot.lane.b32.xlu0 %v133, 126
  %v146 = vpop.permute.xlu0 %145
  %147 = vrot.lane.b32.xlu0 %v134, 126
  %v148 = vpop.permute.xlu0 %147
  %149 = vrot.lane.b32.xlu0 %v135, 126
  %v150 = vpop.permute.xlu0 %149
  %151 = vrot.lane.b32.xlu0 %v136, 126
  %v152 = vpop.permute.xlu0 %151
  %153 = vrot.lane.b32.xlu0 %v137, 126
  %v154 = vpop.permute.xlu0 %153
  %155 = vrot.lane.b32.xlu0 %v138, 126
  %v156 = vpop.permute.xlu0 %155
  %vm157 = vcmask 1031168
  %v158 = vsel %vm157, %v146, %v148
  %v159 = vsel %vm157, %v148, %v150
  %v160 = vsel %vm157, %v152, %v154
  %v161 = vsel %vm157, %v154, %v156
  %v168 = vadd.f32 %v119, %v158
  %v169 = vadd.f32 %v120, %v159
  %v170 = vadd.f32 %v121, %v150
  %v171 = vadd.f32 %v122, %v160
  %v172 = vadd.f32 %v123, %v161
  %v173 = vadd.f32 %v124, %v156
  %174 = vset.pattern.permute.xlu0 3
  %175 = vperm.xlu0 %174, %v23
  %v176 = vpop.permute.xlu0 %175
  %178 = vset.pattern.permute.xlu0 3
  %179 = vperm.xlu0 %178, %v24
  %v180 = vpop.permute.xlu0 %179
  %v182 = vadd.f32 %v168, %v176
  %v183 = vadd.f32 %v169, %v176
  %v184 = vadd.f32 %v170, %v176
  %v185 = vadd.f32 %v171, %v180
  %v186 = vadd.f32 %v172, %v180
  %v187 = vadd.f32 %v173, %v180
  %194 = vrot.lane.b32.xlu0 %v182, 127
  %v195 = vpop.permute.xlu0 %194
  %196 = vrot.lane.b32.xlu0 %v183, 127
  %v197 = vpop.permute.xlu0 %196
  %198 = vrot.lane.b32.xlu0 %v184, 127
  %v199 = vpop.permute.xlu0 %198
  %200 = vrot.lane.b32.xlu0 %v185, 127
  %v201 = vpop.permute.xlu0 %200
  %202 = vrot.lane.b32.xlu0 %v186, 127
  %v203 = vpop.permute.xlu0 %202
  %204 = vrot.lane.b32.xlu0 %v187, 127
  %v205 = vpop.permute.xlu0 %204
  %v206 = vsel %vm108, %v195, %v197
  %v207 = vsel %vm108, %v197, %v199
  %v208 = vsel %vm108, %v201, %v203
  %v209 = vsel %vm108, %v203, %v205
  %v216 = vmax.f32 %v182, %v206
  %v217 = vmax.f32 %v183, %v207
  %v218 = vmax.f32 %v184, %v199
  %v219 = vmax.f32 %v185, %v208
  %v220 = vmax.f32 %v186, %v209
  %v221 = vmax.f32 %v187, %v205
  %v222 = vmax.f32 %v216, 0.0
  %v223 = vmax.f32 %v217, 0.0
  %v224 = vmax.f32 %v218, 0.0
  %v225 = vmax.f32 %v219, 0.0
  %v226 = vmax.f32 %v220, 0.0
  %v227 = vmax.f32 %v221, 0.0
  %v228 = vld [vmem:[%s2] sm:$0xff]
  %v229 = vld [vmem:[%s2 + $0x8] sm:$0xff]
  %v230 = vld [vmem:[%s2 + $0x10] sm:$0xff]
  %v231 = vld [vmem:[%s2 + $0x18] sm:$0xff]
  %v232 = vld [vmem:[%s2 + $0x20] sm:$0xff]
  %v233 = vld [vmem:[%s2 + $0x28] sm:$0xff]
  %v234 = vld [vmem:[%s2 + $0x30] sm:$0xff]
  %v235 = vld [vmem:[%s2 + $0x38] sm:$0xff]
  %v236 = vld [vmem:[%s2 + $0x40] sm:$0xff]
  %v237 = vld [vmem:[%s2 + $0x48] sm:$0xff]
  %v238 = vld [vmem:[%s2 + $0x50] sm:$0xff]
  %v239 = vld [vmem:[%s2 + $0x58] sm:$0xff]
  %v240 = vld [vmem:[%s2 + $0x60] sm:$0xff]
  %v241 = vld [vmem:[%s2 + $0x68] sm:$0xff]
  %v242 = vld [vmem:[%s2 + $0x70] sm:$0xff]
  %v243 = vld [vmem:[%s2 + $0x78] sm:$0xff]
  %v244 = vld [vmem:[%s2 + $0x80] sm:$0xff]
  %v245 = vld [vmem:[%s2 + $0x88] sm:$0xff]
  %v246 = vld [vmem:[%s2 + $0x90] sm:$0xff]
  %v247 = vld [vmem:[%s2 + $0x98] sm:$0xff]
  %v248 = vld [vmem:[%s2 + $0xa0] sm:$0xff]
  %v249 = vld [vmem:[%s2 + $0xa8] sm:$0xff]
  %v250 = vld [vmem:[%s2 + $0xb0] sm:$0xff]
  %v251 = vld [vmem:[%s2 + $0xb8] sm:$0xff]
  %v252 = vld [vmem:[%s2 + $0xc0] sm:$0xff]
  %v253 = vld [vmem:[%s2 + $0xc8] sm:$0xff]
  %v254 = vld [vmem:[%s2 + $0xd0] sm:$0xff]
  %v255 = vld [vmem:[%s2 + $0xd8] sm:$0xff]
  %v256 = vld [vmem:[%s2 + $0xe0] sm:$0xff]
  %v257 = vld [vmem:[%s2 + $0xe8] sm:$0xff]
  %v258 = vld [vmem:[%s2 + $0xf0] sm:$0xff]
  %v259 = vld [vmem:[%s2 + $0xf8] sm:$0xff]
  %v260 = vld [vmem:[%s2 + $0x100] sm:$0xff]
  %v261 = vld [vmem:[%s2 + $0x108] sm:$0xff]
  %v262 = vld [vmem:[%s2 + $0x110] sm:$0xff]
  %v263 = vld [vmem:[%s2 + $0x118] sm:$0xff]
  %v264 = vld [vmem:[%s2 + $0x120] sm:$0xff]
  %v265 = vld [vmem:[%s2 + $0x128] sm:$0xff]
  %v266 = vld [vmem:[%s2 + $0x130] sm:$0xff]
  %v267 = vld [vmem:[%s2 + $0x138] sm:$0xff]
  %v268 = vld [vmem:[%s2 + $0x140] sm:$0xff]
  %v269 = vld [vmem:[%s2 + $0x148] sm:$0xff]
  %v270 = vld [vmem:[%s2 + $0x150] sm:$0xff]
  %v271 = vld [vmem:[%s2 + $0x158] sm:$0xff]
  %v272 = vld [vmem:[%s2 + $0x160] sm:$0xff]
  %v273 = vld [vmem:[%s2 + $0x168] sm:$0xff]
  %v274 = vld [vmem:[%s2 + $0x170] sm:$0xff]
  %v275 = vld [vmem:[%s2 + $0x178] sm:$0xff]
  %v276 = vld [vmem:[%s2 + $0x180] sm:$0xff]
  %v277 = vld [vmem:[%s2 + $0x188] sm:$0xff]
  %v278 = vld [vmem:[%s2 + $0x190] sm:$0xff]
  %v279 = vld [vmem:[%s2 + $0x198] sm:$0xff]
  %v280 = vld [vmem:[%s2 + $0x1a0] sm:$0xff]
  %v281 = vld [vmem:[%s2 + $0x1a8] sm:$0xff]
  %v282 = vld [vmem:[%s2 + $0x1b0] sm:$0xff]
  %v283 = vld [vmem:[%s2 + $0x1b8] sm:$0xff]
  %v284 = vld [vmem:[%s2 + $0x1c0] sm:$0xff]
  %v285 = vld [vmem:[%s2 + $0x1c8] sm:$0xff]
  %v286 = vld [vmem:[%s2 + $0x1d0] sm:$0xff]
  %v287 = vld [vmem:[%s2 + $0x1d8] sm:$0xff]
  %v288 = vld [vmem:[%s2 + $0x1e0] sm:$0xff]
  %v289 = vld [vmem:[%s2 + $0x1e8] sm:$0xff]
  %v290 = vld [vmem:[%s2 + $0x1f0] sm:$0xff]
  %v291 = vld [vmem:[%s2 + $0x1f8] sm:$0xff]
  %v292 = vld [vmem:[%s2 + $0x200] sm:$0xff]
  %v293 = vld [vmem:[%s2 + $0x208] sm:$0xff]
  %v294 = vld [vmem:[%s2 + $0x210] sm:$0xff]
  %v295 = vld [vmem:[%s2 + $0x218] sm:$0xff]
  %v296 = vld [vmem:[%s2 + $0x220] sm:$0xff]
  %v297 = vld [vmem:[%s2 + $0x228] sm:$0xff]
  %v298 = vld [vmem:[%s2 + $0x230] sm:$0x7f]
  %v299 = vld [vmem:[%s2 + $0x238] sm:$0x7f]
  %vm300 = vcmask 252928
  %v302 = vsel %vm300, %v224, 0
  %v305 = vsel %vm300, %v227, 0
  %vm307 = vcmask 1046528
  %v309 = vsel %vm307, %v298, 0
  %v312 = vsel %vm307, %v299, 0
  %314 = vmatpush.msra.mxu0 %v258
  %315 = vmatpush.msra.mxu0 %v256
  %316 = vmatpush.msra.mxu0 %v254
  %317 = vmatpush.msra.mxu0 %v252
  %318 = vmatpush.msra.mxu0 %v250
  %319 = vmatpush.msra.mxu0 %v248
  %320 = vmatpush.msra.mxu0 %v246
  %321 = vmatpush.msra.mxu0 %v244
  %322 = vmatpush.msra.mxu0 %v242
  %323 = vmatpush.msra.mxu0 %v240
  %324 = vmatpush.msra.mxu0 %v238
  %325 = vmatpush.msra.mxu0 %v236
  %326 = vmatpush.msra.mxu0 %v234
  %327 = vmatpush.msra.mxu0 %v232
  %328 = vmatpush.msra.mxu0 %v230
  %329 = vmatpush.msra.mxu0 %v228
  %330 = vmatmul.f32.gmra.mxu0 %v222
  %v331 = vpop.f32.mrf.mxu0
  %v332 = vadd.f32 0.0, %v331
  %333 = vmatmul.f32.gmra.mxu0 %v225
  %v334 = vpop.f32.mrf.mxu0
  %v335 = vadd.f32 0.0, %v334
  %336 = vdwg.mxu0
  %337 = vmatpush.msra.mxu0 %v290
  %338 = vmatpush.msra.mxu0 %v288
  %339 = vmatpush.msra.mxu0 %v286
  %340 = vmatpush.msra.mxu0 %v284
  %341 = vmatpush.msra.mxu0 %v282
  %342 = vmatpush.msra.mxu0 %v280
  %343 = vmatpush.msra.mxu0 %v278
  %344 = vmatpush.msra.mxu0 %v276
  %345 = vmatpush.msra.mxu0 %v274
  %346 = vmatpush.msra.mxu0 %v272
  %347 = vmatpush.msra.mxu0 %v270
  %348 = vmatpush.msra.mxu0 %v268
  %349 = vmatpush.msra.mxu0 %v266
  %350 = vmatpush.msra.mxu0 %v264
  %351 = vmatpush.msra.mxu0 %v262
  %352 = vmatpush.msra.mxu0 %v260
  %353 = vmatmul.f32.gmra.mxu0 %v223
  %v354 = vpop.f32.mrf.mxu0
  %v355 = vadd.f32 %v332, %v354
  %356 = vmatmul.f32.gmra.mxu0 %v226
  %v357 = vpop.f32.mrf.mxu0
  %v358 = vadd.f32 %v335, %v357
  %359 = vdwg.mxu0
  %360 = vmatpush.msra.mxu0 0.0
  %361 = vmatpush.msra.mxu0 0.0
  %362 = vmatpush.msra.mxu0 0.0
  %363 = vmatpush.msra.mxu0 0.0
  %364 = vmatpush.msra.mxu0 0.0
  %365 = vmatpush.msra.mxu0 0.0
  %366 = vmatpush.msra.mxu0 0.0
  %367 = vmatpush.msra.mxu0 0.0
  %368 = vmatpush.msra.mxu0 0.0
  %369 = vmatpush.msra.mxu0 0.0
  %370 = vmatpush.msra.mxu0 0.0
  %371 = vmatpush.msra.mxu0 0.0
  %372 = vmatpush.msra.mxu0 %v309
  %373 = vmatpush.msra.mxu0 %v296
  %374 = vmatpush.msra.mxu0 %v294
  %375 = vmatpush.msra.mxu0 %v292
  %376 = vmatmul.f32.gmra.mxu0 %v302
  %v377 = vpop.f32.mrf.mxu0
  %v378 = vadd.f32 %v355, %v377
  %379 = vmatmul.f32.gmra.mxu0 %v305
  %v380 = vpop.f32.mrf.mxu0
  %v381 = vadd.f32 %v358, %v380
  %382 = vdwg.mxu0
  %383 = vmatpush.msra.mxu0 %v259
  %384 = vmatpush.msra.mxu0 %v257
  %385 = vmatpush.msra.mxu0 %v255
  %386 = vmatpush.msra.mxu0 %v253
  %387 = vmatpush.msra.mxu0 %v251
  %388 = vmatpush.msra.mxu0 %v249
  %389 = vmatpush.msra.mxu0 %v247
  %390 = vmatpush.msra.mxu0 %v245
  %391 = vmatpush.msra.mxu0 %v243
  %392 = vmatpush.msra.mxu0 %v241
  %393 = vmatpush.msra.mxu0 %v239
  %394 = vmatpush.msra.mxu0 %v237
  %395 = vmatpush.msra.mxu0 %v235
  %396 = vmatpush.msra.mxu0 %v233
  %397 = vmatpush.msra.mxu0 %v231
  %398 = vmatpush.msra.mxu0 %v229
  %399 = vmatmul.f32.gmra.mxu0 %v222
  %v400 = vpop.f32.mrf.mxu0
  %v401 = vadd.f32 0.0, %v400
  %402 = vmatmul.f32.gmra.mxu0 %v225
  %v403 = vpop.f32.mrf.mxu0
  %v404 = vadd.f32 0.0, %v403
  %405 = vdwg.mxu0
  %406 = vmatpush.msra.mxu0 %v291
  %407 = vmatpush.msra.mxu0 %v289
  %408 = vmatpush.msra.mxu0 %v287
  %409 = vmatpush.msra.mxu0 %v285
  %410 = vmatpush.msra.mxu0 %v283
  %411 = vmatpush.msra.mxu0 %v281
  %412 = vmatpush.msra.mxu0 %v279
  %413 = vmatpush.msra.mxu0 %v277
  %414 = vmatpush.msra.mxu0 %v275
  %415 = vmatpush.msra.mxu0 %v273
  %416 = vmatpush.msra.mxu0 %v271
  %417 = vmatpush.msra.mxu0 %v269
  %418 = vmatpush.msra.mxu0 %v267
  %419 = vmatpush.msra.mxu0 %v265
  %420 = vmatpush.msra.mxu0 %v263
  %421 = vmatpush.msra.mxu0 %v261
  %422 = vmatmul.f32.gmra.mxu0 %v223
  %v423 = vpop.f32.mrf.mxu0
  %v424 = vadd.f32 %v401, %v423
  %425 = vmatmul.f32.gmra.mxu0 %v226
  %v426 = vpop.f32.mrf.mxu0
  %v427 = vadd.f32 %v404, %v426
  %428 = vdwg.mxu0
  %429 = vmatpush.msra.mxu0 0.0
  %430 = vmatpush.msra.mxu0 0.0
  %431 = vmatpush.msra.mxu0 0.0
  %432 = vmatpush.msra.mxu0 0.0
  %433 = vmatpush.msra.mxu0 0.0
  %434 = vmatpush.msra.mxu0 0.0
  %435 = vmatpush.msra.mxu0 0.0
  %436 = vmatpush.msra.mxu0 0.0
  %437 = vmatpush.msra.mxu0 0.0
  %438 = vmatpush.msra.mxu0 0.0
  %439 = vmatpush.msra.mxu0 0.0
  %440 = vmatpush.msra.mxu0 0.0
  %441 = vmatpush.msra.mxu0 %v312
  %442 = vmatpush.msra.mxu0 %v297
  %443 = vmatpush.msra.mxu0 %v295
  %444 = vmatpush.msra.mxu0 %v293
  %445 = vmatmul.f32.gmra.mxu0 %v302
  %v446 = vpop.f32.mrf.mxu0
  %v447 = vadd.f32 %v424, %v446
  %448 = vmatmul.f32.gmra.mxu0 %v305
  %v449 = vpop.f32.mrf.mxu0
  %v450 = vadd.f32 %v427, %v449
  %451 = vdwg.mxu0
  %456 = vrot.lane.b32.xlu0 %v378, 127
  %v457 = vpop.permute.xlu0 %456
  %458 = vrot.lane.b32.xlu0 %v447, 127
  %v459 = vpop.permute.xlu0 %458
  %460 = vrot.lane.b32.xlu0 %v381, 127
  %v461 = vpop.permute.xlu0 %460
  %462 = vrot.lane.b32.xlu0 %v450, 127
  %v463 = vpop.permute.xlu0 %462
  %v464 = vsel %vm108, %v457, %v459
  %v465 = vsel %vm108, %v461, %v463
  %470 = vrot.lane.b32.xlu0 %v378, 126
  %v471 = vpop.permute.xlu0 %470
  %472 = vrot.lane.b32.xlu0 %v447, 126
  %v473 = vpop.permute.xlu0 %472
  %474 = vrot.lane.b32.xlu0 %v381, 126
  %v475 = vpop.permute.xlu0 %474
  %476 = vrot.lane.b32.xlu0 %v450, 126
  %v477 = vpop.permute.xlu0 %476
  %v478 = vsel %vm157, %v471, %v473
  %v479 = vsel %vm157, %v475, %v477
  %485 = vset.pattern.permute.xlu0 48
  %486 = vperm.xlu0 %485, %v25
  %v487 = vpop.permute.xlu0 %486
  %490 = vset.pattern.permute.xlu0 48
  %491 = vperm.xlu0 %490, %v26
  %v492 = vpop.permute.xlu0 %491
  %495 = vset.pattern.permute.xlu0 48
  %496 = vperm.xlu0 %495, %v27
  %v497 = vpop.permute.xlu0 %496
  %500 = vset.pattern.permute.xlu0 48
  %501 = vperm.xlu0 %500, %v28
  %v502 = vpop.permute.xlu0 %501
  %vm504 = vcmask 392192
  %v505 = vsel %vm504, %v25, 0
  %v507 = vsel %vm504, %v26, 0
  %v509 = vsel %vm504, %v27, 0
  %v511 = vsel %vm504, %v28, 0
  %513 = vmatpush.msra.mxu0 0.0
  %514 = vmatpush.msra.mxu0 0.0
  %515 = vmatpush.msra.mxu0 0.0
  %516 = vmatpush.msra.mxu0 0.0
  %517 = vmatpush.msra.mxu0 0.0
  %518 = vmatpush.msra.mxu0 0.0
  %519 = vmatpush.msra.mxu0 0.0
  %520 = vmatpush.msra.mxu0 0.0
  %521 = vmatpush.msra.mxu0 0.0
  %522 = vmatpush.msra.mxu0 0.0
  %523 = vmatpush.msra.mxu0 %v479
  %524 = vmatpush.msra.mxu0 %v478
  %525 = vmatpush.msra.mxu0 %v465
  %526 = vmatpush.msra.mxu0 %v464
  %527 = vmatpush.msra.mxu0 %v381
  %528 = vmatpush.msra.mxu0 %v378
  %529 = vmatmul.f32.gmra.mxu0 %v505
  %v530 = vpop.f32.mrf.mxu0
  %v531 = vadd.f32 %v487, %v530
  %532 = vmatmul.f32.gmra.mxu0 %v507
  %v533 = vpop.f32.mrf.mxu0
  %v534 = vadd.f32 %v492, %v533
  %535 = vmatmul.f32.gmra.mxu0 %v509
  %v536 = vpop.f32.mrf.mxu0
  %v537 = vadd.f32 %v497, %v536
  %538 = vmatmul.f32.gmra.mxu0 %v511
  %v539 = vpop.f32.mrf.mxu0
  %v540 = vadd.f32 %v502, %v539
  %541 = vdwg.mxu0
  %542 = vmatpush.msra.mxu0 0.0
  %543 = vmatpush.msra.mxu0 0.0
  %544 = vmatpush.msra.mxu0 0.0
  %545 = vmatpush.msra.mxu0 0.0
  %546 = vmatpush.msra.mxu0 0.0
  %547 = vmatpush.msra.mxu0 0.0
  %548 = vmatpush.msra.mxu0 0.0
  %549 = vmatpush.msra.mxu0 0.0
  %550 = vmatpush.msra.mxu0 0.0
  %551 = vmatpush.msra.mxu0 0.0
  %552 = vmatpush.msra.mxu0 %v477
  %553 = vmatpush.msra.mxu0 %v473
  %554 = vmatpush.msra.mxu0 %v463
  %555 = vmatpush.msra.mxu0 %v459
  %556 = vmatpush.msra.mxu0 %v450
  %557 = vmatpush.msra.mxu0 %v447
  %558 = vmatmul.f32.gmra.mxu0 %v505
  %v559 = vpop.f32.mrf.mxu0
  %v560 = vadd.f32 %v487, %v559
  %561 = vmatmul.f32.gmra.mxu0 %v507
  %v562 = vpop.f32.mrf.mxu0
  %v563 = vadd.f32 %v492, %v562
  %564 = vmatmul.f32.gmra.mxu0 %v509
  %v565 = vpop.f32.mrf.mxu0
  %v566 = vadd.f32 %v497, %v565
  %567 = vmatmul.f32.gmra.mxu0 %v511
  %v568 = vpop.f32.mrf.mxu0
  %v569 = vadd.f32 %v502, %v568
  %570 = vdwg.mxu0
  %579 = vrot.lane.b32.xlu0 %v531, 127
  %v580 = vpop.permute.xlu0 %579
  %581 = vrot.lane.b32.xlu0 %v560, 127
  %v582 = vpop.permute.xlu0 %581
  %583 = vrot.lane.b32.xlu0 %v534, 127
  %v584 = vpop.permute.xlu0 %583
  %585 = vrot.lane.b32.xlu0 %v563, 127
  %v586 = vpop.permute.xlu0 %585
  %587 = vrot.lane.b32.xlu0 %v537, 127
  %v588 = vpop.permute.xlu0 %587
  %589 = vrot.lane.b32.xlu0 %v566, 127
  %v590 = vpop.permute.xlu0 %589
  %591 = vrot.lane.b32.xlu0 %v540, 127
  %v592 = vpop.permute.xlu0 %591
  %593 = vrot.lane.b32.xlu0 %v569, 127
  %v594 = vpop.permute.xlu0 %593
  %v595 = vsel %vm108, %v580, %v582
  %v596 = vsel %vm108, %v584, %v586
  %v597 = vsel %vm108, %v588, %v590
  %v598 = vsel %vm108, %v592, %v594
  %v607 = vmax.f32 %v531, %v595
  %v608 = vmax.f32 %v560, %v582
  %v609 = vmax.f32 %v534, %v596
  %v610 = vmax.f32 %v563, %v586
  %v611 = vmax.f32 %v537, %v597
  %v612 = vmax.f32 %v566, %v590
  %v613 = vmax.f32 %v540, %v598
  %v614 = vmax.f32 %v569, %v594
  %v615 = vmax.f32 %v607, 0.0
  %v616 = vmax.f32 %v608, 0.0
  %v617 = vmax.f32 %v609, 0.0
  %v618 = vmax.f32 %v610, 0.0
  %v619 = vmax.f32 %v611, 0.0
  %v620 = vmax.f32 %v612, 0.0
  %v621 = vmax.f32 %v613, 0.0
  %v622 = vmax.f32 %v614, 0.0
  %v623 = vld [vmem:[%s3] sm:$0xff]
  %v624 = vld [vmem:[%s3 + $0x8] sm:$0xff]
  %v625 = vld [vmem:[%s3 + $0x10] sm:$0xff]
  %v626 = vld [vmem:[%s3 + $0x18] sm:$0xff]
  %v627 = vld [vmem:[%s3 + $0x20] sm:$0xff]
  %v628 = vld [vmem:[%s3 + $0x28] sm:$0xff]
  %v629 = vld [vmem:[%s3 + $0x30] sm:$0xff]
  %v630 = vld [vmem:[%s3 + $0x38] sm:$0xff]
  %v631 = vld [vmem:[%s3 + $0x40] sm:$0xff]
  %v632 = vld [vmem:[%s3 + $0x48] sm:$0xff]
  %v633 = vld [vmem:[%s3 + $0x50] sm:$0xff]
  %v634 = vld [vmem:[%s3 + $0x58] sm:$0xff]
  %v635 = vld [vmem:[%s3 + $0x60] sm:$0xff]
  %v636 = vld [vmem:[%s3 + $0x68] sm:$0xff]
  %v637 = vld [vmem:[%s3 + $0x70] sm:$0xff]
  %v638 = vld [vmem:[%s3 + $0x78] sm:$0xff]
  %v639 = vld [vmem:[%s3 + $0x80] sm:$0xff]
  %v640 = vld [vmem:[%s3 + $0x88] sm:$0x1f]
  %v641 = vld [vmem:[%s4] sm:$0xff]
  %v642 = vld [vmem:[%s4 + $0x8] sm:$0xff]
  %v643 = vld [vmem:[%s4 + $0x10] sm:$0xff]
  %v644 = vld [vmem:[%s4 + $0x18] sm:$0xff]
  %v645 = vld [vmem:[%s4 + $0x20] sm:$0xff]
  %v646 = vld [vmem:[%s4 + $0x28] sm:$0xff]
  %v647 = vld [vmem:[%s4 + $0x30] sm:$0xff]
  %v648 = vld [vmem:[%s4 + $0x38] sm:$0xff]
  %v649 = vld [vmem:[%s4 + $0x40] sm:$0xff]
  %v650 = vld [vmem:[%s4 + $0x48] sm:$0xff]
  %v651 = vld [vmem:[%s4 + $0x50] sm:$0xff]
  %v652 = vld [vmem:[%s4 + $0x58] sm:$0xff]
  %v653 = vld [vmem:[%s4 + $0x60] sm:$0xff]
  %v654 = vld [vmem:[%s4 + $0x68] sm:$0xff]
  %v655 = vld [vmem:[%s4 + $0x70] sm:$0xff]
  %v656 = vld [vmem:[%s4 + $0x78] sm:$0xff]
  %v657 = vld [vmem:[%s4 + $0x80] sm:$0xff]
  %v658 = vld [vmem:[%s4 + $0x88] sm:$0x1f]
  %vm659 = vcmask 105472
  %v661 = vsel %vm659, %v618, 0
  %v664 = vsel %vm659, %v622, 0
  %vm666 = vcmask 1044480
  %v668 = vsel %vm666, %v658, 0
  %670 = vmatpush.msra.mxu0 %v656
  %671 = vmatpush.msra.mxu0 %v655
  %672 = vmatpush.msra.mxu0 %v654
  %673 = vmatpush.msra.mxu0 %v653
  %674 = vmatpush.msra.mxu0 %v652
  %675 = vmatpush.msra.mxu0 %v651
  %676 = vmatpush.msra.mxu0 %v650
  %677 = vmatpush.msra.mxu0 %v649
  %678 = vmatpush.msra.mxu0 %v648
  %679 = vmatpush.msra.mxu0 %v647
  %680 = vmatpush.msra.mxu0 %v646
  %681 = vmatpush.msra.mxu0 %v645
  %682 = vmatpush.msra.mxu0 %v644
  %683 = vmatpush.msra.mxu0 %v643
  %684 = vmatpush.msra.mxu0 %v642
  %685 = vmatpush.msra.mxu0 %v641
  %686 = vmatmul.f32.gmra.mxu0 %v617
  %v687 = vpop.f32.mrf.mxu0
  %v688 = vadd.f32 0.0, %v687
  %689 = vmatmul.f32.gmra.mxu0 %v621
  %v690 = vpop.f32.mrf.mxu0
  %v691 = vadd.f32 0.0, %v690
  %692 = vdwg.mxu0
  %693 = vmatpush.msra.mxu0 0.0
  %694 = vmatpush.msra.mxu0 0.0
  %695 = vmatpush.msra.mxu0 0.0
  %696 = vmatpush.msra.mxu0 0.0
  %697 = vmatpush.msra.mxu0 0.0
  %698 = vmatpush.msra.mxu0 0.0
  %699 = vmatpush.msra.mxu0 0.0
  %700 = vmatpush.msra.mxu0 0.0
  %701 = vmatpush.msra.mxu0 0.0
  %702 = vmatpush.msra.mxu0 0.0
  %703 = vmatpush.msra.mxu0 0.0
  %704 = vmatpush.msra.mxu0 0.0
  %705 = vmatpush.msra.mxu0 0.0
  %706 = vmatpush.msra.mxu0 0.0
  %707 = vmatpush.msra.mxu0 %v668
  %708 = vmatpush.msra.mxu0 %v657
  %709 = vmatmul.f32.gmra.mxu0 %v661
  %v710 = vpop.f32.mrf.mxu0
  %v711 = vadd.f32 %v688, %v710
  %712 = vmatmul.f32.gmra.mxu0 %v664
  %v713 = vpop.f32.mrf.mxu0
  %v714 = vadd.f32 %v691, %v713
  %715 = vdwg.mxu0
  %v717 = vsel %vm659, %v616, 0
  %v720 = vsel %vm659, %v620, 0
  %v723 = vsel %vm666, %v640, 0
  %725 = vmatpush.msra.mxu0 %v638
  %726 = vmatpush.msra.mxu0 %v637
  %727 = vmatpush.msra.mxu0 %v636
  %728 = vmatpush.msra.mxu0 %v635
  %729 = vmatpush.msra.mxu0 %v634
  %730 = vmatpush.msra.mxu0 %v633
  %731 = vmatpush.msra.mxu0 %v632
  %732 = vmatpush.msra.mxu0 %v631
  %733 = vmatpush.msra.mxu0 %v630
  %734 = vmatpush.msra.mxu0 %v629
  %735 = vmatpush.msra.mxu0 %v628
  %736 = vmatpush.msra.mxu0 %v627
  %737 = vmatpush.msra.mxu0 %v626
  %738 = vmatpush.msra.mxu0 %v625
  %739 = vmatpush.msra.mxu0 %v624
  %740 = vmatpush.msra.mxu0 %v623
  %741 = vmatmul.f32.gmra.mxu0 %v615
  %v742 = vpop.f32.mrf.mxu0
  %v743 = vadd.f32 %v711, %v742
  %744 = vmatmul.f32.gmra.mxu0 %v619
  %v745 = vpop.f32.mrf.mxu0
  %v746 = vadd.f32 %v714, %v745
  %747 = vdwg.mxu0
  %748 = vmatpush.msra.mxu0 0.0
  %749 = vmatpush.msra.mxu0 0.0
  %750 = vmatpush.msra.mxu0 0.0
  %751 = vmatpush.msra.mxu0 0.0
  %752 = vmatpush.msra.mxu0 0.0
  %753 = vmatpush.msra.mxu0 0.0
  %754 = vmatpush.msra.mxu0 0.0
  %755 = vmatpush.msra.mxu0 0.0
  %756 = vmatpush.msra.mxu0 0.0
  %757 = vmatpush.msra.mxu0 0.0
  %758 = vmatpush.msra.mxu0 0.0
  %759 = vmatpush.msra.mxu0 0.0
  %760 = vmatpush.msra.mxu0 0.0
  %761 = vmatpush.msra.mxu0 0.0
  %762 = vmatpush.msra.mxu0 %v723
  %763 = vmatpush.msra.mxu0 %v639
  %764 = vmatmul.f32.gmra.mxu0 %v717
  %v765 = vpop.f32.mrf.mxu0
  %v766 = vadd.f32 %v743, %v765
  %767 = vmatmul.f32.gmra.mxu0 %v720
  %v768 = vpop.f32.mrf.mxu0
  %v769 = vadd.f32 %v746, %v768
  %770 = vdwg.mxu0
  %v771 = vperm.slane %v29, 0
  %v772 = vadd.f32 %v766, %v771
  %v773 = vadd.f32 %v769, %v771
  %v774 = vmax.f32 %v772, 0.0
  %v775 = vmax.f32 %v773, 0.0
  %v776 = vld [vmem:[%s5] sm:$0xff]
  %v777 = vld [vmem:[%s5 + $0x8] sm:$0xff]
  %v778 = vld [vmem:[%s5 + $0x10] sm:$0xff]
  %v779 = vld [vmem:[%s5 + $0x18] sm:$0xff]
  %v780 = vld [vmem:[%s5 + $0x20] sm:$0xff]
  %v781 = vld [vmem:[%s5 + $0x28] sm:$0xff]
  %v782 = vld [vmem:[%s5 + $0x30] sm:$0xff]
  %v783 = vld [vmem:[%s5 + $0x38] sm:$0xff]
  %v784 = vld [vmem:[%s5 + $0x40] sm:$0xff]
  %v785 = vld [vmem:[%s5 + $0x48] sm:$0xff]
  %v786 = vld [vmem:[%s5 + $0x50] sm:$0xff]
  %v787 = vld [vmem:[%s5 + $0x58] sm:$0xff]
  %v788 = vld [vmem:[%s5 + $0x60] sm:$0xff]
  %v789 = vld [vmem:[%s5 + $0x68] sm:$0xff]
  %v790 = vld [vmem:[%s5 + $0x70] sm:$0xff]
  %v791 = vperm.slane %v30, 0
  %vm792 = vcmask 982016
  %v794 = vsel %vm792, %v774, 0
  %v797 = vsel %vm792, %v775, 0
  %799 = vmatpush.msra.mxu0 0.0
  %800 = vmatpush.msra.mxu0 %v790
  %801 = vmatpush.msra.mxu0 %v789
  %802 = vmatpush.msra.mxu0 %v788
  %803 = vmatpush.msra.mxu0 %v787
  %804 = vmatpush.msra.mxu0 %v786
  %805 = vmatpush.msra.mxu0 %v785
  %806 = vmatpush.msra.mxu0 %v784
  %807 = vmatpush.msra.mxu0 %v783
  %808 = vmatpush.msra.mxu0 %v782
  %809 = vmatpush.msra.mxu0 %v781
  %810 = vmatpush.msra.mxu0 %v780
  %811 = vmatpush.msra.mxu0 %v779
  %812 = vmatpush.msra.mxu0 %v778
  %813 = vmatpush.msra.mxu0 %v777
  %814 = vmatpush.msra.mxu0 %v776
  %815 = vmatmul.f32.gmra.mxu0 %v794
  %v816 = vpop.f32.mrf.mxu0
  %v817 = vadd.f32 %v791, %v816
  %818 = vmatmul.f32.gmra.mxu0 %v797
  %v819 = vpop.f32.mrf.mxu0
  %v820 = vadd.f32 %v791, %v819
  %821 = vdwg.mxu0
  %v822 = vmax.f32 %v817, 0.0
  %v823 = vmax.f32 %v820, 0.0
  %v824 = vperm.slane %v31, 0
  %vm825 = vcmask 687104
  %v827 = vsel %vm825, %v822, 0
  %v830 = vsel %vm825, %v823, 0
  %vm832 = vcmask 1043456
  %v834 = vsel %vm832, %v42, 0
  %836 = vmatpush.msra.mxu0 0.0
  %837 = vmatpush.msra.mxu0 0.0
  %838 = vmatpush.msra.mxu0 0.0
  %839 = vmatpush.msra.mxu0 0.0
  %840 = vmatpush.msra.mxu0 0.0
  %841 = vmatpush.msra.mxu0 %v834
  %842 = vmatpush.msra.mxu0 %v41
  %843 = vmatpush.msra.mxu0 %v40
  %844 = vmatpush.msra.mxu0 %v39
  %845 = vmatpush.msra.mxu0 %v38
  %846 = vmatpush.msra.mxu0 %v37
  %847 = vmatpush.msra.mxu0 %v36
  %848 = vmatpush.msra.mxu0 %v35
  %849 = vmatpush.msra.mxu0 %v34
  %850 = vmatpush.msra.mxu0 %v33
  %851 = vmatpush.msra.mxu0 %v32
  %852 = vmatmul.f32.gmra.mxu0 %v827
  %v853 = vpop.f32.mrf.mxu0
  %v854 = vadd.f32 %v824, %v853
  %855 = vmatmul.f32.gmra.mxu0 %v830
  %v856 = vpop.f32.mrf.mxu0
  %v857 = vadd.f32 %v824, %v856
  %858 = vdwg.mxu0
  %859 = vst [vmem:[%s6] sm:$0xff] %v854
  %860 = vst [vmem:[%s6 + $0x8] sm:$0xff] %v857
  // Predicated region
  $region26: #{cnn_forward.1} parent=0 // pred_check
    _
  $region27: #{cnn_forward.1} parent=0 // pred_check_branch
    %862 = sbr.rel (0) target = $region29
  $region28: #{cnn_forward.1} parent=0 // pred_region
    _
  $region29: #{cnn_forward.1} parent=0 // pred_fallthru
    _
  // Predicated region
  $region30: #{cnn_forward.1} parent=0 // pred_check
    _
  $region31: #{cnn_forward.1} parent=0 // pred_check_branch
    %864 = sbr.rel (0) target = $region33
  $region32: #{cnn_forward.1} parent=0 // pred_region
    _
  $region33: #{cnn_forward.1} parent=0 // pred_fallthru
    _

</llo_original>
